<compile_context>
chip_gen: v6e
topology: v6e:2x2x1
jax: 0.10.0
libtpu: 0.0.40
codegen_flags: <defaults>
</compile_context>

<pallas_src>
import jax
import jax.numpy as jnp
from jax.experimental import pallas as pl
from jax.experimental.pallas import tpu as pltpu


# ----------------------------- tile selection ------------------------------ #

def _pick_lane_tile(hw: int, target: int = 2048, align: int = 128) -> int:
    """Largest divisor of hw that is a multiple of `align` and <= target.
    Falls back to the full extent (always a legal block dim) otherwise."""
    if hw <= target:
        return hw
    best = 0
    t = align
    while t <= target:
        if hw % t == 0:
            best = t
        t += align
    return best if best else hw


def _pick_batch_tile(n: int, c: int, thw: int,
                     budget_bytes: int = 2 * 1024 * 1024) -> int:
    """Largest divisor of n keeping an f32 (tn, c, thw) block under `budget_bytes`,
    capped at n//2 so the batch grid axis has >= 2 tiles (pipelining + megacore)
    whenever n >= 2."""
    row_bytes = c * thw * 4  # compute happens in f32
    max_tn = max(1, budget_bytes // row_bytes)
    cap = max(1, min(n // 2, max_tn)) if n >= 2 else 1
    for cand in range(cap, 0, -1):
        if n % cand == 0:
            return cand
    return 1


# -------------------------------- kernels ---------------------------------- #

def _stats_kernel(x_ref, mean_ref, m2_ref):
    """Accumulate per-channel running mean / M2 across the H*W reduction axis.

    x_ref:    (TN, C, THW) block of x.
    mean_ref: (1, C, 1) f32 output block (resident across the reduction axis).
    m2_ref:   (1, C, 1) f32 output block (sum of squared deviations).
    """
    r = pl.program_id(1)                                   # reduction step
    x = x_ref[...].astype(jnp.float32)                     # (TN, C, THW)
    nb = x.shape[0] * x.shape[2]                           # elems per channel/block

    mu_b = jnp.sum(x, axis=(0, 2), keepdims=True) * (1.0 / nb)   # (1, C, 1)
    d = x - mu_b
    ssd_b = jnp.sum(d * d, axis=(0, 2), keepdims=True)            # (1, C, 1)

    @pl.when(r == 0)
    def _():
        mean_ref[...] = mu_b
        m2_ref[...] = ssd_b

    @pl.when(r > 0)
    def _():
        # Chan parallel-variance combination of (accumulated) with (this block).
        n_prev = r.astype(jnp.float32) * nb
        n_new = n_prev + nb
        mean_prev = mean_ref[...]
        delta = mu_b - mean_prev
        mean_ref[...] = mean_prev + delta * (nb / n_new)
        m2_ref[...] = m2_ref[...] + ssd_b + (delta * delta) * (n_prev * (nb / n_new))


def _apply_kernel(x_ref, scale_ref, shift_ref, o_ref):
    """out = x * scale + shift  (scale = 1/std, shift = -mean/std); no divides."""
    x = x_ref[...].astype(jnp.float32)
    o_ref[...] = (x * scale_ref[...] + shift_ref[...]).astype(o_ref.dtype)


# -------------------------------- wrapper ----------------------------------- #

def normalize_batch(x: jax.Array) -> jax.Array:
    """Equivalent of NormalizeBatch(axis=[0, 2, 3]).forward for NCHW input."""
    n, c, h, w = x.shape
    hw = h * w
    r_total = n * hw

    # NCHW -> (N, C, H*W): pure reshape, no HBM transpose.
    x3 = x.reshape(n, c, hw)

    thw = _pick_lane_tile(hw)            # lane-dense chunk (multiple of 128 or full)
    tn = _pick_batch_tile(n, c, thw)     # batch tile under the VMEM budget
    gn, ghw = n // tn, hw // thw

    vmem_limit = 32 * 1024 * 1024        # safe on v5e/v6e/v7x; blocks are <= ~2 MiB

    # ---- pass 1: per batch-tile partial per-channel (mean, M2) ---- #
    mean_p, m2_p = pl.pallas_call(
        _stats_kernel,
        out_shape=(
            jax.ShapeDtypeStruct((gn, c, 1), jnp.float32),
            jax.ShapeDtypeStruct((gn, c, 1), jnp.float32),
        ),
        grid_spec=pltpu.PrefetchScalarGridSpec(
            num_scalar_prefetch=0,
            grid=(gn, ghw),
            in_specs=[pl.BlockSpec((tn, c, thw), lambda i, j: (i, 0, j))],
            out_specs=[
                pl.BlockSpec((1, c, 1), lambda i, j: (i, 0, 0)),
                pl.BlockSpec((1, c, 1), lambda i, j: (i, 0, 0)),
            ],
        ),
        compiler_params=pltpu.CompilerParams(
            dimension_semantics=("parallel", "arbitrary"),
            vmem_limit_bytes=vmem_limit,
        ),
    )(x3)

    # ---- exact combination of equal-count partials (tiny, plain JAX) ---- #
    nb_tile = tn * hw                                   # per-channel count per tile
    mean_t = mean_p[:, :, 0]                            # (gn, C)
    m2_t = m2_p[:, :, 0]                                # (gn, C)
    g_mean = jnp.mean(mean_t, axis=0)                   # equal tile counts
    ss = jnp.sum(m2_t, axis=0) + nb_tile * jnp.sum((mean_t - g_mean) ** 2, axis=0)

    # torch.std default is unbiased (divide by R-1); R == 1 yields NaN (matches torch).
    var = ss / jnp.float32(r_total - 1)
    eps = jnp.float32(jnp.finfo(jnp.float32).eps)       # torch.finfo() default = float32
    fmax = jnp.float32(jnp.finfo(jnp.float32).max)
    std = jnp.clip(jnp.sqrt(var), eps, fmax)
    scale = (1.0 / std).reshape(1, c, 1).astype(jnp.float32)
    shift = (-g_mean / std).reshape(1, c, 1).astype(jnp.float32)

    # ---- pass 2: fully-parallel fused scale/shift over x ---- #
    out3 = pl.pallas_call(
        _apply_kernel,
        out_shape=jax.ShapeDtypeStruct((n, c, hw), x.dtype),
        grid_spec=pltpu.PrefetchScalarGridSpec(
            num_scalar_prefetch=0,
            grid=(gn, ghw),
            in_specs=[
                pl.BlockSpec((tn, c, thw), lambda i, j: (i, 0, j)),
                pl.BlockSpec((1, c, 1), lambda i, j: (0, 0, 0)),
                pl.BlockSpec((1, c, 1), lambda i, j: (0, 0, 0)),
            ],
            out_specs=pl.BlockSpec((tn, c, thw), lambda i, j: (i, 0, j)),
        ),
        compiler_params=pltpu.CompilerParams(
            dimension_semantics=("parallel", "parallel"),
            vmem_limit_bytes=vmem_limit,
        ),
    )(x3, scale, shift)

    # (N, C, H*W) -> NCHW: pure reshape, no HBM transpose.
    return out3.reshape(n, c, h, w)


if __name__ == "__main__":
    key = jax.random.PRNGKey(0)
    x = jax.random.normal(key, (2, 4, 16, 16), dtype=jnp.float32) * 3.0 + 1.5

    out = jax.block_until_ready(jax.jit(normalize_batch)(x))

    # Reference (unbiased std, clamped to [float32 eps, float32 max]).
    mean_ref = jnp.mean(x, axis=(0, 2, 3), keepdims=True)
    var_ref = jnp.sum((x - mean_ref) ** 2, axis=(0, 2, 3), keepdims=True) / (
        x.shape[0] * x.shape[2] * x.shape[3] - 1
    )
    std_ref = jnp.clip(
        jnp.sqrt(var_ref), jnp.finfo(jnp.float32).eps, jnp.finfo(jnp.float32).max
    )
    ref = (x - mean_ref) / std_ref

    assert out.shape == x.shape and out.dtype == x.dtype
    assert jnp.allclose(out, ref, atol=1e-5, rtol=1e-5)

    print("KERNEL_OK")
</pallas_src>

<mosaic_0001>
module attributes {stable_mosaic.version = 11 : i64} {
  func.func @_stats_kernel(%arg0: i32, %arg1: i32, %arg2: memref<1x4x256xf32, #tpu.memory_space<vmem>>, %arg3: memref<1x4x1xf32, #tpu.memory_space<vmem>>, %arg4: memref<1x4x1xf32, #tpu.memory_space<vmem>>) attributes {dimension_semantics = [#tpu.dimension_semantics<parallel>, #tpu.dimension_semantics<arbitrary>], iteration_bounds = array<i64: 2, 1>, scalar_prefetch = 0 : i64, scratch_operands = 0 : i64, tpu.core_type = #tpu.core_type<tc>, window_params = [{transform_indices = @transform_0, window_bounds = array<i64: 1, 4, 256>}, {transform_indices = @transform_1, window_bounds = array<i64: 1, 4, 1>}, {transform_indices = @transform_2, window_bounds = array<i64: 1, 4, 1>}]} {
    %c0 = arith.constant 0 : index
    %c0_0 = arith.constant 0 : index
    %c0_1 = arith.constant 0 : index
    %0 = vector.load %arg2[%c0, %c0_0, %c0_1] : memref<1x4x256xf32, #tpu.memory_space<vmem>>, vector<1x4x256xf32>
    %cst = arith.constant dense<0.000000e+00> : vector<4xf32>
    %1 = vector.multi_reduction <add>, %0, %cst [0, 2] : vector<1x4x256xf32> to vector<4xf32>
    %2 = vector.shape_cast %1 : vector<4xf32> to vector<1x4x1xf32>
    %cst_2 = arith.constant 3.906250e-03 : f32
    %3 = vector.broadcast %cst_2 : f32 to vector<1x4x1xf32>
    %4 = arith.mulf %2, %3 : vector<1x4x1xf32>
    %5 = vector.broadcast %4 : vector<1x4x1xf32> to vector<1x4x256xf32>
    %6 = arith.subf %0, %5 : vector<1x4x256xf32>
    %7 = arith.mulf %6, %6 : vector<1x4x256xf32>
    %cst_3 = arith.constant dense<0.000000e+00> : vector<4xf32>
    %8 = vector.multi_reduction <add>, %7, %cst_3 [0, 2] : vector<1x4x256xf32> to vector<4xf32>
    %9 = vector.shape_cast %8 : vector<4xf32> to vector<1x4x1xf32>
    %c0_i32 = arith.constant 0 : i32
    %10 = arith.cmpi eq, %arg1, %c0_i32 : i32
    %11 = arith.extui %10 : i1 to i32
    %c0_i32_4 = arith.constant 0 : i32
    %12 = arith.cmpi ne, %11, %c0_i32_4 : i32
    scf.if %12 {
      %c0_7 = arith.constant 0 : index
      %c0_8 = arith.constant 0 : index
      %c0_9 = arith.constant 0 : index
      %16 = vector.load %arg3[%c0_7, %c0_8, %c0_9] : memref<1x4x1xf32, #tpu.memory_space<vmem>>, vector<1x4x1xf32>
      tpu.vector_store %arg3[%c0_7, %c0_8, %c0_9], %4 {strides = array<i32>} : memref<1x4x1xf32, #tpu.memory_space<vmem>>, vector<1x4x1xf32>,
      %c0_10 = arith.constant 0 : index
      %c0_11 = arith.constant 0 : index
      %c0_12 = arith.constant 0 : index
      %17 = vector.load %arg4[%c0_10, %c0_11, %c0_12] : memref<1x4x1xf32, #tpu.memory_space<vmem>>, vector<1x4x1xf32>
      tpu.vector_store %arg4[%c0_10, %c0_11, %c0_12], %9 {strides = array<i32>} : memref<1x4x1xf32, #tpu.memory_space<vmem>>, vector<1x4x1xf32>,
    } else {
    }
    %c0_i32_5 = arith.constant 0 : i32
    %13 = arith.cmpi sgt, %arg1, %c0_i32_5 : i32
    %14 = arith.extui %13 : i1 to i32
    %c0_i32_6 = arith.constant 0 : i32
    %15 = arith.cmpi ne, %14, %c0_i32_6 : i32
    scf.if %15 {
      %16 = arith.sitofp %arg1 : i32 to f32
      %cst_7 = arith.constant 2.560000e+02 : f32
      %17 = arith.mulf %16, %cst_7 : f32
      %cst_8 = arith.constant 2.560000e+02 : f32
      %18 = arith.addf %17, %cst_8 : f32
      %c0_9 = arith.constant 0 : index
      %c0_10 = arith.constant 0 : index
      %c0_11 = arith.constant 0 : index
      %19 = vector.load %arg3[%c0_9, %c0_10, %c0_11] : memref<1x4x1xf32, #tpu.memory_space<vmem>>, vector<1x4x1xf32>
      %20 = arith.subf %4, %19 : vector<1x4x1xf32>
      %cst_12 = arith.constant 2.560000e+02 : f32
      %21 = arith.divf %cst_12, %18 : f32
      %22 = vector.broadcast %21 : f32 to vector<1x4x1xf32>
      %23 = arith.mulf %20, %22 : vector<1x4x1xf32>
      %24 = arith.addf %19, %23 : vector<1x4x1xf32>
      %c0_13 = arith.constant 0 : index
      %c0_14 = arith.constant 0 : index
      %c0_15 = arith.constant 0 : index
      %25 = vector.load %arg3[%c0_13, %c0_14, %c0_15] : memref<1x4x1xf32, #tpu.memory_space<vmem>>, vector<1x4x1xf32>
      tpu.vector_store %arg3[%c0_13, %c0_14, %c0_15], %24 {strides = array<i32>} : memref<1x4x1xf32, #tpu.memory_space<vmem>>, vector<1x4x1xf32>,
      %c0_16 = arith.constant 0 : index
      %c0_17 = arith.constant 0 : index
      %c0_18 = arith.constant 0 : index
      %26 = vector.load %arg4[%c0_16, %c0_17, %c0_18] : memref<1x4x1xf32, #tpu.memory_space<vmem>>, vector<1x4x1xf32>
      %27 = arith.addf %26, %9 : vector<1x4x1xf32>
      %28 = arith.mulf %20, %20 : vector<1x4x1xf32>
      %cst_19 = arith.constant 2.560000e+02 : f32
      %29 = arith.divf %cst_19, %18 : f32
      %30 = arith.mulf %17, %29 : f32
      %31 = vector.broadcast %30 : f32 to vector<1x4x1xf32>
      %32 = arith.mulf %28, %31 : vector<1x4x1xf32>
      %33 = arith.addf %27, %32 : vector<1x4x1xf32>
      %c0_20 = arith.constant 0 : index
      %c0_21 = arith.constant 0 : index
      %c0_22 = arith.constant 0 : index
      %34 = vector.load %arg4[%c0_20, %c0_21, %c0_22] : memref<1x4x1xf32, #tpu.memory_space<vmem>>, vector<1x4x1xf32>
      tpu.vector_store %arg4[%c0_20, %c0_21, %c0_22], %33 {strides = array<i32>} : memref<1x4x1xf32, #tpu.memory_space<vmem>>, vector<1x4x1xf32>,
    } else {
    }
    return
  }
  func.func @transform_0(%arg0: i32, %arg1: i32) -> (i32, i32, i32) {
    %c0_i32 = arith.constant 0 : i32
    %c0_i32_0 = arith.constant 0 : i32
    return %arg0, %c0_i32, %arg1 : i32, i32, i32
  }
  func.func @transform_1(%arg0: i32, %arg1: i32) -> (i32, i32, i32) {
    %c0_i32 = arith.constant 0 : i32
    %c0_i32_0 = arith.constant 0 : i32
    %c0_i32_1 = arith.constant 0 : i32
    return %arg0, %c0_i32, %c0_i32_0 : i32, i32, i32
  }
  func.func @transform_2(%arg0: i32, %arg1: i32) -> (i32, i32, i32) {
    %c0_i32 = arith.constant 0 : i32
    %c0_i32_0 = arith.constant 0 : i32
    %c0_i32_1 = arith.constant 0 : i32
    return %arg0, %c0_i32, %c0_i32_0 : i32, i32, i32
  }
}

module attributes {stable_mosaic.version = 11 : i64} {
  func.func @_apply_kernel(%arg0: i32, %arg1: i32, %arg2: memref<1x4x256xf32, #tpu.memory_space<vmem>>, %arg3: memref<1x4x1xf32, #tpu.memory_space<vmem>>, %arg4: memref<1x4x1xf32, #tpu.memory_space<vmem>>, %arg5: memref<1x4x256xf32, #tpu.memory_space<vmem>>) attributes {dimension_semantics = [#tpu.dimension_semantics<parallel>, #tpu.dimension_semantics<parallel>], iteration_bounds = array<i64: 2, 1>, scalar_prefetch = 0 : i64, scratch_operands = 0 : i64, tpu.core_type = #tpu.core_type<tc>, window_params = [{transform_indices = @transform_0, window_bounds = array<i64: 1, 4, 256>}, {pipeline_mode = #tpu.pipeline_mode<synchronous>, transform_indices = @transform_1, window_bounds = array<i64: 1, 4, 1>}, {pipeline_mode = #tpu.pipeline_mode<synchronous>, transform_indices = @transform_2, window_bounds = array<i64: 1, 4, 1>}, {transform_indices = @transform_3, window_bounds = array<i64: 1, 4, 256>}]} {
    %c0 = arith.constant 0 : index
    %c0_0 = arith.constant 0 : index
    %c0_1 = arith.constant 0 : index
    %0 = vector.load %arg2[%c0, %c0_0, %c0_1] : memref<1x4x256xf32, #tpu.memory_space<vmem>>, vector<1x4x256xf32>
    %c0_2 = arith.constant 0 : index
    %c0_3 = arith.constant 0 : index
    %c0_4 = arith.constant 0 : index
    %1 = vector.load %arg3[%c0_2, %c0_3, %c0_4] : memref<1x4x1xf32, #tpu.memory_space<vmem>>, vector<1x4x1xf32>
    %2 = vector.broadcast %1 : vector<1x4x1xf32> to vector<1x4x256xf32>
    %3 = arith.mulf %0, %2 : vector<1x4x256xf32>
    %c0_5 = arith.constant 0 : index
    %c0_6 = arith.constant 0 : index
    %c0_7 = arith.constant 0 : index
    %4 = vector.load %arg4[%c0_5, %c0_6, %c0_7] : memref<1x4x1xf32, #tpu.memory_space<vmem>>, vector<1x4x1xf32>
    %5 = vector.broadcast %4 : vector<1x4x1xf32> to vector<1x4x256xf32>
    %6 = arith.addf %3, %5 : vector<1x4x256xf32>
    %c0_8 = arith.constant 0 : index
    %c0_9 = arith.constant 0 : index
    %c0_10 = arith.constant 0 : index
    %7 = vector.load %arg5[%c0_8, %c0_9, %c0_10] : memref<1x4x256xf32, #tpu.memory_space<vmem>>, vector<1x4x256xf32>
    tpu.vector_store %arg5[%c0_8, %c0_9, %c0_10], %6 {strides = array<i32>} : memref<1x4x256xf32, #tpu.memory_space<vmem>>, vector<1x4x256xf32>,
    return
  }
  func.func @transform_0(%arg0: i32, %arg1: i32) -> (i32, i32, i32) {
    %c0_i32 = arith.constant 0 : i32
    %c0_i32_0 = arith.constant 0 : i32
    return %arg0, %c0_i32, %arg1 : i32, i32, i32
  }
  func.func @transform_1(%arg0: i32, %arg1: i32) -> (i32, i32, i32) {
    %c0_i32 = arith.constant 0 : i32
    %c0_i32_0 = arith.constant 0 : i32
    %c0_i32_1 = arith.constant 0 : i32
    %c0_i32_2 = arith.constant 0 : i32
    return %c0_i32, %c0_i32_0, %c0_i32_1 : i32, i32, i32
  }
  func.func @transform_2(%arg0: i32, %arg1: i32) -> (i32, i32, i32) {
    %c0_i32 = arith.constant 0 : i32
    %c0_i32_0 = arith.constant 0 : i32
    %c0_i32_1 = arith.constant 0 : i32
    %c0_i32_2 = arith.constant 0 : i32
    return %c0_i32, %c0_i32_0, %c0_i32_1 : i32, i32, i32
  }
  func.func @transform_3(%arg0: i32, %arg1: i32) -> (i32, i32, i32) {
    %c0_i32 = arith.constant 0 : i32
    %c0_i32_0 = arith.constant 0 : i32
    return %arg0, %c0_i32, %arg1 : i32, i32, i32
  }
}

</mosaic_0001>

<llo_original>
// kernel: normalize_batch.2
$region0: #{normalize_batch.2}
  #allocation0 [shape = 'u32[]', space=smem, size = 0x4, offset = 0x4, fixed_abs, tag = 'smem constant byte address 0x4 - core index']
  #allocation1 [shape = 'u32[144,128]{1,0:T(1,128)}', space=vmem, size = 0x12000, scoped, tag = 'internal scratch']
  %s0 = inlined_call_operand.vmem [shape: f32[2,4,256], index: 0, kind: input, shape index: {}]
  %s1 = inlined_call_operand.vmem [shape: f32[2,4,1], index: 1, kind: output, shape index: {0}]
  %s2 = inlined_call_operand.vmem [shape: f32[2,4,1], index: 2, kind: output, shape index: {1}]
  %3 = xla_tuple %s1, %s2
  %s4 = sld [smem:[#allocation0]]
  $region53: #{normalize_batch.2} parent=0
    _
  %s6 = ssub.s32 1, %s4
  %s7 = scalar_select 0, %s6, %s4
  loop: start=0, step=1, limit=4
  $region2: #{normalize_batch.2} parent=0 // loop_pre_header
    _
  $region3: #{normalize_batch.2} parent=0 // loop_header
    %s9 = sphi 0, %s13
    %p10 = scmp.ge.s32.totalorder %s9, 4
    %s16 = sphi 0, %s28
    %s17 = sphi 0, %s24
    %s18 = sphi 0, %s16
    %s19 = sphi 0, %s17
    %s20 = sphi 0, %s18
    %s21 = sphi 0, %s19
    %s33 = sphi 0, %s35
    %s36 = sphi 0, %s33
    %s37 = sphi 0, %s36
    %s53 = sphi 0, %s37
    %s59 = sphi 0, %s61
    %s62 = sphi 0, %s59
    %s63 = sphi 0, %s62
    %s79 = sphi 0, %s63
    %s85 = sphi 0, %s87
    %s88 = sphi 0, %s85
    %s89 = sphi 0, %s88
    %s105 = sphi 0, %s89
  $region4: #{normalize_batch.2} parent=0 // loop_header_branch
    %12 = sbr.rel (%p10) target = $region8
  $region5: #{normalize_batch.2} parent=0 // loop_body
    %s14 = ssub.s32 %s9, 1
    %s15 = ssub.s32 %s9, 2
    %s22 = sadd.s32 1, %s17
    %p23 = scmp.ge.s32.totalorder %s22, 1
    %s24 = scalar_select %p23, 0, %s22
    %s25 = sadd.s32 1, %s16
    %s26 = scalar_select %p23, %s25, %s16
    %p27 = scmp.ge.s32.totalorder %s26, 2
    %s28 = scalar_select %p27, 0, %s26
    %s29 = ssub.s32 %s16, %s28
    %s30 = ssub.s32 %s17, %s24
    %s31 = sor.u32 %s29, %s30
    %p32 = scmp.eq.s32.totalorder %s31, 0
    %s34 = sadd.s32 %s33, 1
    %s35 = scalar_select %p32, %s33, %s34
    %p38 = pneg %p32
    %p39 = scmp.eq.s32.totalorder %s9, 1
    %p40 = por %p38, %p39
    %p41 = scmp.ne.s32.totalorder %s33, %s36
    %p42 = scmp.eq.s32.totalorder %s9, 0
    %p43 = por %p41, %p42
    %p44 = scmp.ne.s32.totalorder %s33, %s36
    %p45 = scmp.eq.s32.totalorder %s14, 1
    %p46 = por %p44, %p45
    %p47 = scmp.ne.s32.totalorder %s36, %s37
    %p48 = scmp.eq.s32.totalorder %s14, 0
    %p49 = por %p47, %p48
    %p50 = scmp.ne.s32.totalorder %s36, %s37
    %p51 = scmp.eq.s32.totalorder %s15, 1
    %p52 = por %p50, %p51
    %p54 = scmp.ne.s32.totalorder %s37, %s53
    %p55 = scmp.eq.s32.totalorder %s15, 0
    %p56 = por %p54, %p55
    %s57 = ssub.s32 %s16, %s28
    %p58 = scmp.eq.s32.totalorder %s57, 0
    %s60 = sadd.s32 %s59, 1
    %s61 = scalar_select %p58, %s59, %s60
    %p64 = pneg %p58
    %p65 = scmp.eq.s32.totalorder %s9, 1
    %p66 = por %p64, %p65
    %p67 = scmp.ne.s32.totalorder %s59, %s62
    %p68 = scmp.eq.s32.totalorder %s9, 0
    %p69 = por %p67, %p68
    %p70 = scmp.ne.s32.totalorder %s59, %s62
    %p71 = scmp.eq.s32.totalorder %s14, 1
    %p72 = por %p70, %p71
    %p73 = scmp.ne.s32.totalorder %s62, %s63
    %p74 = scmp.eq.s32.totalorder %s14, 0
    %p75 = por %p73, %p74
    %p76 = scmp.ne.s32.totalorder %s62, %s63
    %p77 = scmp.eq.s32.totalorder %s15, 1
    %p78 = por %p76, %p77
    %p80 = scmp.ne.s32.totalorder %s63, %s79
    %p81 = scmp.eq.s32.totalorder %s15, 0
    %p82 = por %p80, %p81
    %s83 = ssub.s32 %s16, %s28
    %p84 = scmp.eq.s32.totalorder %s83, 0
    %s86 = sadd.s32 %s85, 1
    %s87 = scalar_select %p84, %s85, %s86
    %p90 = pneg %p84
    %p91 = scmp.eq.s32.totalorder %s9, 1
    %p92 = por %p90, %p91
    %p93 = scmp.ne.s32.totalorder %s85, %s88
    %p94 = scmp.eq.s32.totalorder %s9, 0
    %p95 = por %p93, %p94
    %p96 = scmp.ne.s32.totalorder %s85, %s88
    %p97 = scmp.eq.s32.totalorder %s14, 1
    %p98 = por %p96, %p97
    %p99 = scmp.ne.s32.totalorder %s88, %s89
    %p100 = scmp.eq.s32.totalorder %s14, 0
    %p101 = por %p99, %p100
    %p102 = scmp.ne.s32.totalorder %s88, %s89
    %p103 = scmp.eq.s32.totalorder %s15, 1
    %p104 = por %p102, %p103
    %p106 = scmp.ne.s32.totalorder %s89, %s105
    %p107 = scmp.eq.s32.totalorder %s15, 0
    %p108 = por %p106, %p107
    %p109 = scmp.le.s32.totalorder 1, %s9
    %p110 = scmp.lt.s32.totalorder %s9, 3
    %p111 = pnand %p109, %p110
    %p112 = pneg %p111
    // Predicated region
    $region9: #{normalize_batch.2} parent=5 // pred_check
      _
    $region10: #{normalize_batch.2} parent=5 // pred_check_branch
      %114 = sbr.rel (%p111) target = $region12
    $region11: #{normalize_batch.2} parent=5 // pred_region
      %s115 = ssub.s32 %s9, 1
    $region12: #{normalize_batch.2} parent=5 // pred_fallthru
      _
    %p116 = scmp.lt.s32.totalorder %s9, 2
    // Predicated region
    $region13: #{normalize_batch.2} parent=5 // pred_check
      %p117 = pneg %p116
    $region14: #{normalize_batch.2} parent=5 // pred_check_branch
      %119 = sbr.rel (%p117) target = $region16
    $region15: #{normalize_batch.2} parent=5 // pred_region
      // Predicated region
      $region17: #{normalize_batch.2} parent=15 // pred_check
        %p120 = pneg %p43
      $region18: #{normalize_batch.2} parent=15 // pred_check_branch
        %122 = sbr.rel (%p120) target = $region20
      $region19: #{normalize_batch.2} parent=15 // pred_region
        %s123 = smul.u32 2, %s17
        %p124 = scmp.lt.s32.totalorder %s16, 1
        %s125 = scalar_select %p124, %s16, 1
        %p126 = scmp.lt.s32.totalorder %s123, 1
        %s127 = scalar_select %p126, %s123, 1
        %s128 = smul.addr %s125, 2
        %s129 = sadd.s32 %s127, %s128
        %s130 = smul.addr %s129, 4
        %s131 = scalar_lea.vmem %s0, %s130
        %s132 = smul.u32 2, %s17
      $region20: #{normalize_batch.2} parent=15 // pred_fallthru
        _
    $region16: #{normalize_batch.2} parent=5 // pred_fallthru
      _
    %p133 = scmp.le.s32.totalorder 1, %s9
    %p134 = scmp.lt.s32.totalorder %s9, 3
    %p135 = pnand %p133, %p134
    %p136 = pneg %p135
    // Predicated region
    $region21: #{normalize_batch.2} parent=5 // pred_check
      _
    $region22: #{normalize_batch.2} parent=5 // pred_check_branch
      %138 = sbr.rel (%p135) target = $region24
    $region23: #{normalize_batch.2} parent=5 // pred_region
      %s139 = ssub.s32 %s9, 1
      %s140 = smul.u32 2, %s19
      %p141 = scmp.lt.s32.totalorder %s18, 1
      %s142 = scalar_select %p141, %s18, 1
      %p143 = scmp.lt.s32.totalorder %s140, 1
      %s144 = scalar_select %p143, %s140, 1
      %s145 = smul.addr %s142, 2
      %s146 = sadd.s32 %s144, %s145
      %s147 = smul.addr %s146, 4
      %s148 = scalar_lea.vmem %s0, %s147
      %p149 = pneg %p49
      %p150 = pneg %p46
      %p151 = pneg %p75
      %p152 = pneg %p72
      %p153 = scmp.lt.s32.totalorder %s18, 1
      %s154 = scalar_select %p153, %s18, 1
      %s155 = smul.addr %s154, 4
      %s156 = scalar_lea.vmem %s1, %s155
      %p157 = pneg %p101
      %p158 = pneg %p98
      %p159 = scmp.lt.s32.totalorder %s18, 1
      %s160 = scalar_select %p159, %s18, 1
      %s161 = smul.addr %s160, 4
      %s162 = scalar_lea.vmem %s2, %s161
      %s163 = smul.u32 2, %s19
      %p164 = scmp.lt.s32.totalorder %s18, 1
      %s165 = scalar_select %p164, %s18, 1
      %p166 = scmp.lt.s32.totalorder %s163, 1
      %s167 = scalar_select %p166, %s163, 1
      %s168 = smul.addr %s165, 2
      %s169 = sadd.s32 %s167, %s168
      %s170 = smul.addr %s169, 4
      %s171 = scalar_lea.vmem %s0, %s170
      %s172 = smul.u32 2, %s19
      %p173 = scmp.lt.s32.totalorder %s18, 1
      %s174 = scalar_select %p173, %s18, 1
      %s175 = smul.addr %s174, 4
      %s176 = scalar_lea.vmem %s1, %s175
      %p177 = scmp.lt.s32.totalorder %s18, 1
      %s178 = scalar_select %p177, %s18, 1
      %s179 = smul.addr %s178, 4
      %s180 = scalar_lea.vmem %s2, %s179
      %v181 = vld [vmem:[%s171] sm:$0xff]
      %v183 = vcombine.high %v181, %v181
      %vm185 = vcmask 1043456
      %v186 = vsel %vm185, %v181, 0.0
      %v187 = vsel %vm185, %v183, 0.0
      %v188 = vadd.f32 %v186, %v187
      %189 = vadd.xlane.f32.xlu0 %v188
      %v190 = vpop.xlane.xlu0 %189
      %v191 = vmul.f32 %v190, 0.00390625
      %v194 = vunpack.c.l.s4 839922192
      %v195 = vunpack.c.0.s8 %v194
      %v196 = vlaneseq
      %v197 = vshrl.u32 %v196, 7
      %v198 = vsub.s32 %v195, %v197
      %v199 = vrot.slane %v191, %v198
      %v201 = vsub.f32 %v181, %v199
      %v202 = vmul.f32 %v201, %v201
      %v204 = vcombine.high %v202, %v202
      %v206 = vsel %vm185, %v202, 0.0
      %v207 = vsel %vm185, %v204, 0.0
      %v208 = vadd.f32 %v206, %v207
      %209 = vadd.xlane.f32.xlu0 %v208
      %v210 = vpop.xlane.xlu0 %209
      %p211 = scmp.eq.s32.totalorder %s19, 0
      // Predicated region
      $region25: #{normalize_batch.2} parent=23 // pred_check
        %p212 = pneg %p211
      $region26: #{normalize_batch.2} parent=23 // pred_check_branch
        %214 = sbr.rel (%p212) target = $region28
      $region27: #{normalize_batch.2} parent=23 // pred_region
        %vm215 = vcmask 3072
        %216 = vst.msk [vmem:[%s176] sm:$0xf] %vm215, %v191
        %217 = vst.msk [vmem:[%s180] sm:$0xf] %vm215, %v210
      $region28: #{normalize_batch.2} parent=23 // pred_fallthru
        _
      %p218 = scmp.gt.s32.totalorder %s19, 0
      // Predicated region
      $region29: #{normalize_batch.2} parent=23 // pred_check
        %p219 = pneg %p218
      $region30: #{normalize_batch.2} parent=23 // pred_check_branch
        %221 = sbr.rel (%p219) target = $region32
      $region31: #{normalize_batch.2} parent=23 // pred_region
        %s222 = scvt.s32.f32 %s19
        %s223 = smul.f32 %s222, 256.0
        %s224 = sadd.f32 %s223, 256.0
        %v225 = vld [vmem:[%s176] sm:$0xf]
        %v226 = vsub.f32 %v191, %v225
        %v227 = vstv %s224
        %v228 = vrcp.pop %v227
        %s229 = vtos %v228
        %s230 = smul.f32 256.0, %s229
        %v231 = vstv %s230
        %v232 = vmul.f32 %v226, %v231
        %v233 = vadd.f32 %v225, %v232
        %vm234 = vcmask 3072
        %235 = vst.msk [vmem:[%s176] sm:$0xf] %vm234, %v233
        %v236 = vld [vmem:[%s180] sm:$0xf]
        %v237 = vadd.f32 %v236, %v210
        %v238 = vmul.f32 %v226, %v226
        %s239 = smul.f32 %s223, %s230
        %v240 = vstv %s239
        %v241 = vmul.f32 %v238, %v240
        %v242 = vadd.f32 %v237, %v241
        %243 = vst.msk [vmem:[%s180] sm:$0xf] %vm234, %v242
      $region32: #{normalize_batch.2} parent=23 // pred_fallthru
        _
      %p244 = scmp.lt.s32.totalorder %s18, 1
      %s245 = scalar_select %p244, %s18, 1
      %s246 = smul.addr %s245, 4
      %s247 = scalar_lea.vmem %s1, %s246
      %p248 = scmp.lt.s32.totalorder %s18, 1
      %s249 = scalar_select %p248, %s18, 1
      %s250 = smul.addr %s249, 4
      %s251 = scalar_lea.vmem %s2, %s250
      // Predicated region
      $region33: #{normalize_batch.2} parent=23 // pred_check
        %p252 = pneg %p72
      $region34: #{normalize_batch.2} parent=23 // pred_check_branch
        %254 = sbr.rel (%p252) target = $region36
      $region35: #{normalize_batch.2} parent=23 // pred_region
        _
      $region36: #{normalize_batch.2} parent=23 // pred_fallthru
        _
      // Predicated region
      $region37: #{normalize_batch.2} parent=23 // pred_check
        %p255 = pneg %p98
      $region38: #{normalize_batch.2} parent=23 // pred_check_branch
        %257 = sbr.rel (%p255) target = $region40
      $region39: #{normalize_batch.2} parent=23 // pred_region
        _
      $region40: #{normalize_batch.2} parent=23 // pred_fallthru
        _
    $region24: #{normalize_batch.2} parent=5 // pred_fallthru
      _
    %p258 = scmp.le.s32.totalorder 2, %s9
    // Predicated region
    $region41: #{normalize_batch.2} parent=5 // pred_check
      %p259 = pneg %p258
    $region42: #{normalize_batch.2} parent=5 // pred_check_branch
      %261 = sbr.rel (%p259) target = $region44
    $region43: #{normalize_batch.2} parent=5 // pred_region
      %s262 = ssub.s32 %s9, 2
      // Predicated region
      $region45: #{normalize_batch.2} parent=43 // pred_check
        %p263 = pneg %p78
      $region46: #{normalize_batch.2} parent=43 // pred_check_branch
        %265 = sbr.rel (%p263) target = $region48
      $region47: #{normalize_batch.2} parent=43 // pred_region
        %p266 = scmp.lt.s32.totalorder %s20, 1
        %s267 = scalar_select %p266, %s20, 1
        %s268 = smul.addr %s267, 4
        %s269 = scalar_lea.vmem %s1, %s268
      $region48: #{normalize_batch.2} parent=43 // pred_fallthru
        _
      // Predicated region
      $region49: #{normalize_batch.2} parent=43 // pred_check
        %p270 = pneg %p104
      $region50: #{normalize_batch.2} parent=43 // pred_check_branch
        %272 = sbr.rel (%p270) target = $region52
      $region51: #{normalize_batch.2} parent=43 // pred_region
        %p273 = scmp.lt.s32.totalorder %s20, 1
        %s274 = scalar_select %p273, %s20, 1
        %s275 = smul.addr %s274, 4
        %s276 = scalar_lea.vmem %s2, %s275
      $region52: #{normalize_batch.2} parent=43 // pred_fallthru
        _
    $region44: #{normalize_batch.2} parent=5 // pred_fallthru
      _
  $region6: #{normalize_batch.2} parent=0 // loop_footer
    %s13 = sadd.s32 1, %s9
  $region7: #{normalize_batch.2} parent=0 // loop_footer_branch
    %8 = sbr.rel target = $region3
  $region8: #{normalize_batch.2} parent=0 // loop_exit
    _

// kernel: normalize_batch.3
$region0: #{normalize_batch.3}
  #allocation0 [shape = 'u32[]', space=smem, size = 0x4, offset = 0x4, fixed_abs, tag = 'smem constant byte address 0x4 - core index']
  #allocation1 [shape = 'u32[144,128]{1,0:T(1,128)}', space=vmem, size = 0x12000, scoped, tag = 'internal scratch']
  %s0 = inlined_call_operand.vmem [shape: f32[2,4,256], index: 0, kind: input, shape index: {}]
  %s1 = inlined_call_operand.vmem [shape: f32[1,4,1], index: 1, kind: input, shape index: {}]
  %s2 = inlined_call_operand.vmem [shape: f32[1,4,1], index: 2, kind: input, shape index: {}]
  %s3 = inlined_call_operand.vmem [shape: f32[2,4,256], index: 3, kind: output, shape index: {}]
  %s4 = sld [smem:[#allocation0]]
  $region45: #{normalize_batch.3} parent=0
    _
  %s6 = ssub.s32 1, %s4
  %s7 = scalar_select 0, %s6, %s4
  loop: start=0, step=1, limit=4
  $region2: #{normalize_batch.3} parent=0 // loop_pre_header
    _
  $region3: #{normalize_batch.3} parent=0 // loop_header
    %s9 = sphi 0, %s13
    %p10 = scmp.ge.s32.totalorder %s9, 4
    %s16 = sphi 0, %s28
    %s17 = sphi 0, %s24
    %s18 = sphi 0, %s16
    %s19 = sphi 0, %s17
    %s20 = sphi 0, %s18
    %s21 = sphi 0, %s19
    %s33 = sphi 0, %s35
    %s36 = sphi 0, %s33
    %s37 = sphi 0, %s36
    %s53 = sphi 0, %s37
    %s57 = sphi 0, %s57
    %s59 = sphi 0, %s57
    %s60 = sphi 0, %s59
    %s74 = sphi 0, %s60
    %s78 = sphi 0, %s78
    %s80 = sphi 0, %s78
    %s81 = sphi 0, %s80
    %s95 = sphi 0, %s81
    %s103 = sphi 0, %s105
    %s106 = sphi 0, %s103
    %s107 = sphi 0, %s106
    %s123 = sphi 0, %s107
  $region4: #{normalize_batch.3} parent=0 // loop_header_branch
    %12 = sbr.rel (%p10) target = $region8
  $region5: #{normalize_batch.3} parent=0 // loop_body
    %s14 = ssub.s32 %s9, 1
    %s15 = ssub.s32 %s9, 2
    %s22 = sadd.s32 1, %s17
    %p23 = scmp.ge.s32.totalorder %s22, 1
    %s24 = scalar_select %p23, 0, %s22
    %s25 = sadd.s32 1, %s16
    %s26 = scalar_select %p23, %s25, %s16
    %p27 = scmp.ge.s32.totalorder %s26, 2
    %s28 = scalar_select %p27, 0, %s26
    %s29 = ssub.s32 %s16, %s28
    %s30 = ssub.s32 %s17, %s24
    %s31 = sor.u32 %s29, %s30
    %p32 = scmp.eq.s32.totalorder %s31, 0
    %s34 = sadd.s32 %s33, 1
    %s35 = scalar_select %p32, %s33, %s34
    %p38 = pneg %p32
    %p39 = scmp.eq.s32.totalorder %s9, 1
    %p40 = por %p38, %p39
    %p41 = scmp.ne.s32.totalorder %s33, %s36
    %p42 = scmp.eq.s32.totalorder %s9, 0
    %p43 = por %p41, %p42
    %p44 = scmp.ne.s32.totalorder %s33, %s36
    %p45 = scmp.eq.s32.totalorder %s14, 1
    %p46 = por %p44, %p45
    %p47 = scmp.ne.s32.totalorder %s36, %s37
    %p48 = scmp.eq.s32.totalorder %s14, 0
    %p49 = por %p47, %p48
    %p50 = scmp.ne.s32.totalorder %s36, %s37
    %p51 = scmp.eq.s32.totalorder %s15, 1
    %p52 = por %p50, %p51
    %p54 = scmp.ne.s32.totalorder %s37, %s53
    %p55 = scmp.eq.s32.totalorder %s15, 0
    %p56 = por %p54, %p55
    %s58 = sadd.s32 %s57, 1
    %p61 = scmp.eq.s32.totalorder %s9, 1
    %p62 = scmp.ne.s32.totalorder %s57, %s59
    %p63 = scmp.eq.s32.totalorder %s9, 0
    %p64 = por %p62, %p63
    %p65 = scmp.ne.s32.totalorder %s57, %s59
    %p66 = scmp.eq.s32.totalorder %s14, 1
    %p67 = por %p65, %p66
    %p68 = scmp.ne.s32.totalorder %s59, %s60
    %p69 = scmp.eq.s32.totalorder %s14, 0
    %p70 = por %p68, %p69
    %p71 = scmp.ne.s32.totalorder %s59, %s60
    %p72 = scmp.eq.s32.totalorder %s15, 1
    %p73 = por %p71, %p72
    %p75 = scmp.ne.s32.totalorder %s60, %s74
    %p76 = scmp.eq.s32.totalorder %s15, 0
    %p77 = por %p75, %p76
    %s79 = sadd.s32 %s78, 1
    %p82 = scmp.eq.s32.totalorder %s9, 1
    %p83 = scmp.ne.s32.totalorder %s78, %s80
    %p84 = scmp.eq.s32.totalorder %s9, 0
    %p85 = por %p83, %p84
    %p86 = scmp.ne.s32.totalorder %s78, %s80
    %p87 = scmp.eq.s32.totalorder %s14, 1
    %p88 = por %p86, %p87
    %p89 = scmp.ne.s32.totalorder %s80, %s81
    %p90 = scmp.eq.s32.totalorder %s14, 0
    %p91 = por %p89, %p90
    %p92 = scmp.ne.s32.totalorder %s80, %s81
    %p93 = scmp.eq.s32.totalorder %s15, 1
    %p94 = por %p92, %p93
    %p96 = scmp.ne.s32.totalorder %s81, %s95
    %p97 = scmp.eq.s32.totalorder %s15, 0
    %p98 = por %p96, %p97
    %s99 = ssub.s32 %s16, %s28
    %s100 = ssub.s32 %s17, %s24
    %s101 = sor.u32 %s99, %s100
    %p102 = scmp.eq.s32.totalorder %s101, 0
    %s104 = sadd.s32 %s103, 1
    %s105 = scalar_select %p102, %s103, %s104
    %p108 = pneg %p102
    %p109 = scmp.eq.s32.totalorder %s9, 1
    %p110 = por %p108, %p109
    %p111 = scmp.ne.s32.totalorder %s103, %s106
    %p112 = scmp.eq.s32.totalorder %s9, 0
    %p113 = por %p111, %p112
    %p114 = scmp.ne.s32.totalorder %s103, %s106
    %p115 = scmp.eq.s32.totalorder %s14, 1
    %p116 = por %p114, %p115
    %p117 = scmp.ne.s32.totalorder %s106, %s107
    %p118 = scmp.eq.s32.totalorder %s14, 0
    %p119 = por %p117, %p118
    %p120 = scmp.ne.s32.totalorder %s106, %s107
    %p121 = scmp.eq.s32.totalorder %s15, 1
    %p122 = por %p120, %p121
    %p124 = scmp.ne.s32.totalorder %s107, %s123
    %p125 = scmp.eq.s32.totalorder %s15, 0
    %p126 = por %p124, %p125
    %p127 = scmp.le.s32.totalorder 1, %s9
    %p128 = scmp.lt.s32.totalorder %s9, 3
    %p129 = pnand %p127, %p128
    %p130 = pneg %p129
    // Predicated region
    $region9: #{normalize_batch.3} parent=5 // pred_check
      _
    $region10: #{normalize_batch.3} parent=5 // pred_check_branch
      %132 = sbr.rel (%p129) target = $region12
    $region11: #{normalize_batch.3} parent=5 // pred_region
      %s133 = ssub.s32 %s9, 1
      // Predicated region
      $region13: #{normalize_batch.3} parent=11 // pred_check
        %p134 = pneg %p70
      $region14: #{normalize_batch.3} parent=11 // pred_check_branch
        %136 = sbr.rel (%p134) target = $region16
      $region15: #{normalize_batch.3} parent=11 // pred_region
        _
      $region16: #{normalize_batch.3} parent=11 // pred_fallthru
        _
      // Predicated region
      $region17: #{normalize_batch.3} parent=11 // pred_check
        %p137 = pneg %p91
      $region18: #{normalize_batch.3} parent=11 // pred_check_branch
        %139 = sbr.rel (%p137) target = $region20
      $region19: #{normalize_batch.3} parent=11 // pred_region
        _
      $region20: #{normalize_batch.3} parent=11 // pred_fallthru
        _
    $region12: #{normalize_batch.3} parent=5 // pred_fallthru
      _
    %p140 = scmp.lt.s32.totalorder %s9, 2
    // Predicated region
    $region21: #{normalize_batch.3} parent=5 // pred_check
      %p141 = pneg %p140
    $region22: #{normalize_batch.3} parent=5 // pred_check_branch
      %143 = sbr.rel (%p141) target = $region24
    $region23: #{normalize_batch.3} parent=5 // pred_region
      // Predicated region
      $region25: #{normalize_batch.3} parent=23 // pred_check
        %p144 = pneg %p43
      $region26: #{normalize_batch.3} parent=23 // pred_check_branch
        %146 = sbr.rel (%p144) target = $region28
      $region27: #{normalize_batch.3} parent=23 // pred_region
        %s147 = smul.u32 2, %s17
        %p148 = scmp.lt.s32.totalorder %s16, 1
        %s149 = scalar_select %p148, %s16, 1
        %p150 = scmp.lt.s32.totalorder %s147, 1
        %s151 = scalar_select %p150, %s147, 1
        %s152 = smul.addr %s149, 2
        %s153 = sadd.s32 %s151, %s152
        %s154 = smul.addr %s153, 4
        %s155 = scalar_lea.vmem %s0, %s154
        %s156 = smul.u32 2, %s17
      $region28: #{normalize_batch.3} parent=23 // pred_fallthru
        _
    $region24: #{normalize_batch.3} parent=5 // pred_fallthru
      _
    %p157 = scmp.le.s32.totalorder 1, %s9
    %p158 = scmp.lt.s32.totalorder %s9, 3
    %p159 = pnand %p157, %p158
    %p160 = pneg %p159
    // Predicated region
    $region29: #{normalize_batch.3} parent=5 // pred_check
      _
    $region30: #{normalize_batch.3} parent=5 // pred_check_branch
      %162 = sbr.rel (%p159) target = $region32
    $region31: #{normalize_batch.3} parent=5 // pred_region
      %s163 = ssub.s32 %s9, 1
      %s164 = smul.u32 2, %s19
      %p165 = scmp.lt.s32.totalorder %s18, 1
      %s166 = scalar_select %p165, %s18, 1
      %p167 = scmp.lt.s32.totalorder %s164, 1
      %s168 = scalar_select %p167, %s164, 1
      %s169 = smul.addr %s166, 2
      %s170 = sadd.s32 %s168, %s169
      %s171 = smul.addr %s170, 4
      %s172 = scalar_lea.vmem %s0, %s171
      %p173 = pneg %p49
      %p174 = pneg %p46
      %p175 = pneg %p70
      %p176 = pneg %p67
      %p177 = pneg %p91
      %p178 = pneg %p88
      %p179 = pneg %p119
      %p180 = pneg %p116
      %s181 = smul.u32 2, %s19
      %p182 = scmp.lt.s32.totalorder %s18, 1
      %s183 = scalar_select %p182, %s18, 1
      %p184 = scmp.lt.s32.totalorder %s181, 1
      %s185 = scalar_select %p184, %s181, 1
      %s186 = smul.addr %s183, 2
      %s187 = sadd.s32 %s185, %s186
      %s188 = smul.addr %s187, 4
      %s189 = scalar_lea.vmem %s3, %s188
      %s190 = smul.u32 2, %s19
      %p191 = scmp.lt.s32.totalorder %s18, 1
      %s192 = scalar_select %p191, %s18, 1
      %p193 = scmp.lt.s32.totalorder %s190, 1
      %s194 = scalar_select %p193, %s190, 1
      %s195 = smul.addr %s192, 2
      %s196 = sadd.s32 %s194, %s195
      %s197 = smul.addr %s196, 4
      %s198 = scalar_lea.vmem %s0, %s197
      %s199 = smul.u32 2, %s19
      %s200 = smul.u32 2, %s19
      %p201 = scmp.lt.s32.totalorder %s18, 1
      %s202 = scalar_select %p201, %s18, 1
      %p203 = scmp.lt.s32.totalorder %s200, 1
      %s204 = scalar_select %p203, %s200, 1
      %s205 = smul.addr %s202, 2
      %s206 = sadd.s32 %s204, %s205
      %s207 = smul.addr %s206, 4
      %s208 = scalar_lea.vmem %s3, %s207
      %s209 = smul.u32 2, %s19
      %v210 = vld [vmem:[%s198] sm:$0xff]
      %v211 = vld [vmem:[%s1] sm:$0xf]
      %213 = vset.pattern.permute.xlu0 0
      %214 = vperm.xlu0 %213, %v211
      %v215 = vpop.permute.xlu0 %214
      %v217 = vunpack.c.l.s4 839922192
      %v218 = vunpack.c.0.s8 %v217
      %v219 = vlaneseq
      %v220 = vshrl.u32 %v219, 7
      %v221 = vsub.s32 %v218, %v220
      %v222 = vrot.slane %v215, %v221
      %v224 = vmul.f32 %v210, %v222
      %v225 = vld [vmem:[%s2] sm:$0xf]
      %227 = vset.pattern.permute.xlu0 0
      %228 = vperm.xlu0 %227, %v225
      %v229 = vpop.permute.xlu0 %228
      %v231 = vunpack.c.l.s4 839922192
      %v232 = vunpack.c.0.s8 %v231
      %v233 = vlaneseq
      %v234 = vshrl.u32 %v233, 7
      %v235 = vsub.s32 %v232, %v234
      %v236 = vrot.slane %v229, %v235
      %v238 = vadd.f32 %v224, %v236
      %239 = vst [vmem:[%s208] sm:$0xff] %v238
      %s240 = smul.u32 2, %s19
      %p241 = scmp.lt.s32.totalorder %s18, 1
      %s242 = scalar_select %p241, %s18, 1
      %p243 = scmp.lt.s32.totalorder %s240, 1
      %s244 = scalar_select %p243, %s240, 1
      %s245 = smul.addr %s242, 2
      %s246 = sadd.s32 %s244, %s245
      %s247 = smul.addr %s246, 4
      %s248 = scalar_lea.vmem %s3, %s247
      // Predicated region
      $region33: #{normalize_batch.3} parent=31 // pred_check
        %p249 = pneg %p116
      $region34: #{normalize_batch.3} parent=31 // pred_check_branch
        %251 = sbr.rel (%p249) target = $region36
      $region35: #{normalize_batch.3} parent=31 // pred_region
        %s252 = smul.u32 2, %s19
      $region36: #{normalize_batch.3} parent=31 // pred_fallthru
        _
    $region32: #{normalize_batch.3} parent=5 // pred_fallthru
      _
    %p253 = scmp.le.s32.totalorder 2, %s9
    // Predicated region
    $region37: #{normalize_batch.3} parent=5 // pred_check
      %p254 = pneg %p253
    $region38: #{normalize_batch.3} parent=5 // pred_check_branch
      %256 = sbr.rel (%p254) target = $region40
    $region39: #{normalize_batch.3} parent=5 // pred_region
      %s257 = ssub.s32 %s9, 2
      // Predicated region
      $region41: #{normalize_batch.3} parent=39 // pred_check
        %p258 = pneg %p122
      $region42: #{normalize_batch.3} parent=39 // pred_check_branch
        %260 = sbr.rel (%p258) target = $region44
      $region43: #{normalize_batch.3} parent=39 // pred_region
        %s261 = smul.u32 2, %s21
        %p262 = scmp.lt.s32.totalorder %s20, 1
        %s263 = scalar_select %p262, %s20, 1
        %p264 = scmp.lt.s32.totalorder %s261, 1
        %s265 = scalar_select %p264, %s261, 1
        %s266 = smul.addr %s263, 2
        %s267 = sadd.s32 %s265, %s266
        %s268 = smul.addr %s267, 4
        %s269 = scalar_lea.vmem %s3, %s268
      $region44: #{normalize_batch.3} parent=39 // pred_fallthru
        _
    $region40: #{normalize_batch.3} parent=5 // pred_fallthru
      _
  $region6: #{normalize_batch.3} parent=0 // loop_footer
    %s13 = sadd.s32 1, %s9
  $region7: #{normalize_batch.3} parent=0 // loop_footer_branch
    %8 = sbr.rel target = $region3
  $region8: #{normalize_batch.3} parent=0 // loop_exit
    _

</llo_original>
